<compile_context>
chip_gen: v7x
topology: tpu7x:2x2x1
jax: 0.10.0
libtpu: 0.0.40
codegen_flags: <defaults>
</compile_context>

<pallas_src>
import functools
from typing import NamedTuple

import jax
import jax.numpy as jnp
from jax.experimental import pallas as pl
from jax.experimental.pallas import tpu as pltpu

_LANE = 128      # lane grain (last dim)
_SUBLANE = 8     # f32 sublane grain (second-to-last dim)

# Backwards-compat guards (do not change behaviour on current JAX).
_CompilerParams = getattr(pltpu, "CompilerParams", None) or getattr(
    pltpu, "TPUCompilerParams")
try:
    import inspect
    _HAS_BUFFERED = hasattr(pl, "Buffered") and (
        "pipeline_mode" in inspect.signature(pl.BlockSpec).parameters)
except Exception:  # pragma: no cover
    _HAS_BUFFERED = False


def _round_up(x, m):
    return ((x + m - 1) // m) * m


def _cdiv(a, b):
    return -(-a // b)


def _block_spec(block_shape, index_map, buffers=None):
    """BlockSpec with optional explicit buffer count (single-buffer resident
    weights); silently falls back to the default pipelining if the installed
    JAX has no pipeline_mode kwarg."""
    if buffers is not None and _HAS_BUFFERED:
        return pl.BlockSpec(block_shape, index_map,
                            pipeline_mode=pl.Buffered(buffers))
    return pl.BlockSpec(block_shape, index_map)


class FFNParams(NamedTuple):
    w1: jax.Array        # (in_p, hid_p), compute dtype (default bf16)
    b1: jax.Array        # (1, hid_p), f32
    w2: jax.Array        # (hid_p, out_p), compute dtype
    b2: jax.Array        # (1, out_p), f32
    out_features: int    # logical (unpadded) output width


def prepare_params(w1, b1, w2, b2, *, compute_dtype=jnp.bfloat16):
    """Pad weights to the (8,128) grain and cast to the compute dtype ONCE,
    at parameter-build time (hoisted out of the per-call path)."""
    in_features, hidden = w1.shape
    hidden2, out_features = w2.shape
    assert hidden2 == hidden and b1.shape == (hidden,) and b2.shape == (out_features,)

    in_p = _round_up(in_features, _LANE)
    hid_p = _round_up(hidden, _LANE)
    out_p = _round_up(out_features, _LANE)

    w1_p = jnp.pad(w1, ((0, in_p - in_features), (0, hid_p - hidden))).astype(compute_dtype)
    w2_p = jnp.pad(w2, ((0, hid_p - hidden), (0, out_p - out_features))).astype(compute_dtype)
    # Biases stay f32 (added to the f32 accumulator).
    b1_p = jnp.pad(b1.astype(jnp.float32), (0, hid_p - hidden)).reshape(1, hid_p)
    b2_p = jnp.pad(b2.astype(jnp.float32), (0, out_p - out_features)).reshape(1, out_p)
    return FFNParams(w1_p, b1_p, w2_p, b2_p, int(out_features))


def _ffn_kernel(x_ref, w1_ref, b1_ref, w2_ref, b2_ref, o_ref, acc_ref):
    k = pl.program_id(1)

    @pl.when(k == 0)
    def _init():
        acc_ref[...] = jnp.zeros_like(acc_ref)

    # fc1 + bias + ReLU for this hidden slice; MXU with f32 accumulation,
    # bias add / ReLU ride in VPU slots, h never leaves vregs.
    h = jnp.maximum(
        jnp.dot(x_ref[...], w1_ref[...], preferred_element_type=jnp.float32)
        + b1_ref[...],
        0.0,
    )
    # Cast after the ReLU (back to bf16/compute dtype for the 2nd MXU pass).
    h = h.astype(w2_ref.dtype)
    # Partial fc2 contribution of this hidden slice, accumulated in f32.
    acc_ref[...] += jnp.dot(h, w2_ref[...], preferred_element_type=jnp.float32)

    @pl.when(k == pl.num_programs(1) - 1)
    def _finalize():
        o_ref[...] = (acc_ref[...] + b2_ref[...]).astype(o_ref.dtype)


@functools.partial(
    jax.jit,
    static_argnames=("out_features", "block_m", "block_k", "vmem_budget_bytes"))
def _ffn_forward(x, w1_p, b1_p, w2_p, b2_p, *, out_features, block_m,
                 block_k, vmem_budget_bytes):
    orig_dtype = x.dtype
    batch, in_features = x.shape
    in_p, hid_p = w1_p.shape
    out_p = w2_p.shape[1]
    compute_dtype = w1_p.dtype
    assert in_features <= in_p

    # ---- M tiling: split batch into cdiv(batch, block_m) tiles, each rounded
    # to the 8-sublane grain (no rounding of the whole batch up to block_m).
    bm = _round_up(max(int(block_m), _SUBLANE), _SUBLANE)
    n_m = max(1, _cdiv(batch, bm))
    tm = _round_up(_cdiv(batch, n_m), _SUBLANE)
    batch_p = n_m * tm

    # ---- VMEM budget (v7x: 64 MiB per TC; v5e/v6e: 128 MiB).
    if vmem_budget_bytes is None:
        try:
            cap = pltpu.get_tpu_info().vmem_capacity_bytes
        except Exception:
            cap = 64 * 1024 * 1024  # conservative (v7x per-TC)
        vmem_budget_bytes = (cap * 3) // 4
    vmem_budget_bytes = int(vmem_budget_bytes)

    w_isz = jnp.dtype(compute_dtype).itemsize
    o_isz = jnp.dtype(orig_dtype).itemsize

    def footprint(bk, n_k):
        wbuf = 1 if n_k == 1 else 2                    # resident weights single-buffered
        weights = wbuf * ((in_p * bk + bk * out_p) * w_isz + bk * 4)   # w1, w2, b1 tiles
        return (weights
                + out_p * 4                            # b2 (f32, single-buffered)
                + 2 * tm * in_p * w_isz                # x tiles (double-buffered)
                + 2 * tm * out_p * o_isz               # out tiles (double-buffered)
                + tm * out_p * 4)                      # f32 accumulator scratch

    # ---- K (hidden) tiling: keep both weights VMEM-resident when they fit
    # the budget; otherwise split the hidden dim and accumulate fc2 in f32.
    if block_k is not None:
        bk = _round_up(min(int(block_k), hid_p), _LANE)
    else:
        bk, n = hid_p, 1
        while footprint(bk, n) > vmem_budget_bytes and bk > _LANE:
            n += 1
            bk = _round_up(_cdiv(hid_p, n), _LANE)
    n_k = _cdiv(hid_p, bk)
    hid_pk = n_k * bk
    if hid_pk != hid_p:
        # Rare fallback path (huge hidden or explicit block_k): extend the
        # inert zero padding of the hidden axis so block_k divides it exactly.
        w1_p = jnp.pad(w1_p, ((0, 0), (0, hid_pk - hid_p)))
        b1_p = jnp.pad(b1_p, ((0, 0), (0, hid_pk - hid_p)))
        w2_p = jnp.pad(w2_p, ((0, hid_pk - hid_p), (0, 0)))

    # ---- x: cast to compute dtype (halves streamed HBM traffic for bf16);
    # fast path skips the pad entirely when shapes are already aligned.
    if x.dtype != compute_dtype:
        x = x.astype(compute_dtype)
    if batch_p != batch or in_p != in_features:
        x = jnp.pad(x, ((0, batch_p - batch), (0, in_p - in_features)))

    vmem_limit = min(128 * 1024 * 1024, max(footprint(bk, n_k) + (4 << 20), 32 << 20))

    # Only shard the M axis across TensorCores when there is enough work;
    # otherwise megacore would duplicate the weight DMA for no compute win.
    m_sem = "parallel" if n_m > 2 else "arbitrary"
    w_bufs = 1 if n_k == 1 else None   # None -> default (2) when blocks vary with k

    grid_spec = pltpu.PrefetchScalarGridSpec(
        num_scalar_prefetch=0,
        grid=(n_m, n_k),
        in_specs=[
            _block_spec((tm, in_p), lambda i, k: (i, 0)),              # x: streamed over M, reused over K
            _block_spec((in_p, bk), lambda i, k: (0, k), w_bufs),      # w1 slice
            _block_spec((1, bk), lambda i, k: (0, k), w_bufs),         # b1 slice (f32)
            _block_spec((bk, out_p), lambda i, k: (k, 0), w_bufs),     # w2 slice
            _block_spec((1, out_p), lambda i, k: (0, 0), 1),           # b2 resident (f32)
        ],
        out_specs=pl.BlockSpec((tm, out_p), lambda i, k: (i, 0)),
        scratch_shapes=[pltpu.VMEM((tm, out_p), jnp.float32)],
    )

    out_padded = pl.pallas_call(
        _ffn_kernel,
        out_shape=jax.ShapeDtypeStruct((batch_p, out_p), orig_dtype),
        grid_spec=grid_spec,
        compiler_params=_CompilerParams(
            dimension_semantics=(m_sem, "arbitrary"),
            vmem_limit_bytes=int(vmem_limit),
        ),
    )(x, w1_p, b1_p, w2_p, b2_p)

    if batch_p != batch or out_p != out_features:
        out_padded = out_padded[:batch, :out_features]
    return out_padded


def simple_feed_forward(x, params: FFNParams, *, block_m=512, block_k=None,
                        vmem_budget_bytes=None):
    """Fused MLP forward: relu(x @ w1 + b1) @ w2 + b2 (params from prepare_params)."""
    return _ffn_forward(x, params.w1, params.b1, params.w2, params.b2,
                        out_features=params.out_features,
                        block_m=block_m, block_k=block_k,
                        vmem_budget_bytes=vmem_budget_bytes)


def init_linear_params(key, in_features, out_features):
    """Deterministic init mimicking torch.nn.Linear defaults
    (uniform in [-1/sqrt(fan_in), 1/sqrt(fan_in)])."""
    kw, kb = jax.random.split(key)
    bound = 1.0 / (in_features ** 0.5)
    # stored as (in_features, out_features) so the kernel computes x @ W
    w = jax.random.uniform(kw, (in_features, out_features), jnp.float32,
                           minval=-bound, maxval=bound)
    b = jax.random.uniform(kb, (out_features,), jnp.float32,
                           minval=-bound, maxval=bound)
    return w, b


def _reference(x, w1, b1, w2, b2):
    return jnp.maximum(x @ w1 + b1, 0.0) @ w2 + b2


# TODO(synk): the module's mse_loss_with_l2 / SGD training loop are host-side
# training utilities, not part of the forward pass, so they are not kernels.

if __name__ == "__main__":
    input_size = 3
    hidden_size = 5
    output_size = 2

    key = jax.random.PRNGKey(0)
    k_x, k_fc1, k_fc2, k_x2, k_fc1b, k_fc2b, k_x3 = jax.random.split(key, 7)

    w1, b1 = init_linear_params(k_fc1, input_size, hidden_size)
    w2, b2 = init_linear_params(k_fc2, hidden_size, output_size)

    # Case 1: exact spec shape (batch=1, 3 -> 5 -> 2), f32 compute path.
    params_f32 = prepare_params(w1, b1, w2, b2, compute_dtype=jnp.float32)
    x1 = jax.random.normal(k_x, (1, input_size), jnp.float32)
    out1 = jax.block_until_ready(simple_feed_forward(x1, params_f32))
    ref1 = _reference(x1, w1, b1, w2, b2)
    assert out1.shape == (1, output_size)
    assert jnp.allclose(out1, ref1, atol=1e-5, rtol=1e-5)

    # Case 2: non-aligned batch, multi-tile M grid, default bf16 compute path.
    params_bf16 = prepare_params(w1, b1, w2, b2)  # compute_dtype=bf16
    x2 = jax.random.normal(k_x2, (20, input_size), jnp.float32)
    out2 = jax.block_until_ready(
        simple_feed_forward(x2, params_bf16, block_m=8))
    ref2 = _reference(x2, w1, b1, w2, b2)
    assert out2.shape == (20, output_size)
    assert jnp.allclose(out2, ref2, atol=3e-2, rtol=3e-2)

    # Case 3: exercise the hidden-dim K-split fallback (grid axis over hid_p,
    # f32 accumulator, ragged-K re-pad), f32 compute for a tight check.
    w1b, b1b = init_linear_params(k_fc1b, 96, 300)
    w2b, b2b = init_linear_params(k_fc2b, 300, 40)
    params_big = prepare_params(w1b, b1b, w2b, b2b, compute_dtype=jnp.float32)
    x3 = jax.random.normal(k_x3, (64, 96), jnp.float32)
    out3 = jax.block_until_ready(
        simple_feed_forward(x3, params_big, block_m=32, block_k=256))
    ref3 = _reference(x3, w1b, b1b, w2b, b2b)
    assert out3.shape == (64, 40)
    assert jnp.allclose(out3, ref3, atol=1e-4, rtol=1e-4)

    print("KERNEL_OK")
</pallas_src>

<mosaic_0001>
module attributes {stable_mosaic.version = 11 : i64} {
  func.func @_ffn_kernel(%arg0: i32, %arg1: i32, %arg2: memref<8x128xf32, #tpu.memory_space<vmem>>, %arg3: memref<128x128xf32, #tpu.memory_space<vmem>>, %arg4: memref<1x128xf32, #tpu.memory_space<vmem>>, %arg5: memref<128x128xf32, #tpu.memory_space<vmem>>, %arg6: memref<1x128xf32, #tpu.memory_space<vmem>>, %arg7: memref<8x128xf32, #tpu.memory_space<vmem>>, %arg8: memref<8x128xf32, #tpu.memory_space<vmem>>) attributes {dimension_semantics = [#tpu.dimension_semantics<arbitrary>, #tpu.dimension_semantics<arbitrary>], iteration_bounds = array<i64: 1, 1>, scalar_prefetch = 0 : i64, scratch_operands = 1 : i64, tpu.core_type = #tpu.core_type<tc>, window_params = [{transform_indices = @transform_0, window_bounds = array<i64: 8, 128>}, {pipeline_mode = #tpu.pipeline_mode<synchronous>, transform_indices = @transform_1, window_bounds = array<i64: 128, 128>}, {pipeline_mode = #tpu.pipeline_mode<synchronous>, transform_indices = @transform_2, window_bounds = array<i64: 1, 128>}, {pipeline_mode = #tpu.pipeline_mode<synchronous>, transform_indices = @transform_3, window_bounds = array<i64: 128, 128>}, {pipeline_mode = #tpu.pipeline_mode<synchronous>, transform_indices = @transform_4, window_bounds = array<i64: 1, 128>}, {transform_indices = @transform_5, window_bounds = array<i64: 8, 128>}]} {
    %c0_i32 = arith.constant 0 : i32
    %0 = arith.cmpi eq, %arg1, %c0_i32 : i32
    %1 = arith.extui %0 : i1 to i32
    %c0_i32_0 = arith.constant 0 : i32
    %2 = arith.cmpi ne, %1, %c0_i32_0 : i32
    scf.if %2 {
      %cst_16 = arith.constant 0.000000e+00 : f32
      %19 = vector.broadcast %cst_16 : f32 to vector<8x128xf32>
      %c0_17 = arith.constant 0 : index
      %c0_18 = arith.constant 0 : index
      %20 = vector.load %arg8[%c0_17, %c0_18] : memref<8x128xf32, #tpu.memory_space<vmem>>, vector<8x128xf32>
      tpu.vector_store %arg8[%c0_17, %c0_18], %19 {strides = array<i32>} : memref<8x128xf32, #tpu.memory_space<vmem>>, vector<8x128xf32>,
    } else {
    }
    %c0 = arith.constant 0 : index
    %c0_1 = arith.constant 0 : index
    %3 = vector.load %arg2[%c0, %c0_1] : memref<8x128xf32, #tpu.memory_space<vmem>>, vector<8x128xf32>
    %c0_2 = arith.constant 0 : index
    %c0_3 = arith.constant 0 : index
    %4 = vector.load %arg3[%c0_2, %c0_3] : memref<128x128xf32, #tpu.memory_space<vmem>>, vector<128x128xf32>
    %cst = arith.constant dense<0.000000e+00> : vector<8x128xf32>
    %5 = tpu.matmul %3, %4, %cst {dimension_numbers = #tpu.dot_dimension_numbers<[1], [0], [0], [1], [0, 0, 1, 1], [], []>} : vector<8x128xf32>, vector<128x128xf32>, vector<8x128xf32> -> vector<8x128xf32>
    %c0_4 = arith.constant 0 : index
    %c0_5 = arith.constant 0 : index
    %6 = vector.load %arg4[%c0_4, %c0_5] : memref<1x128xf32, #tpu.memory_space<vmem>>, vector<1x128xf32>
    %7 = vector.broadcast %6 : vector<1x128xf32> to vector<8x128xf32>
    %8 = arith.addf %5, %7 : vector<8x128xf32>
    %cst_6 = arith.constant 0.000000e+00 : f32
    %9 = vector.broadcast %cst_6 : f32 to vector<8x128xf32>
    %10 = arith.maximumf %8, %9 : vector<8x128xf32>
    %c0_7 = arith.constant 0 : index
    %c0_8 = arith.constant 0 : index
    %11 = vector.load %arg8[%c0_7, %c0_8] : memref<8x128xf32, #tpu.memory_space<vmem>>, vector<8x128xf32>
    %c0_9 = arith.constant 0 : index
    %c0_10 = arith.constant 0 : index
    %12 = vector.load %arg5[%c0_9, %c0_10] : memref<128x128xf32, #tpu.memory_space<vmem>>, vector<128x128xf32>
    %cst_11 = arith.constant dense<0.000000e+00> : vector<8x128xf32>
    %13 = tpu.matmul %10, %12, %cst_11 {dimension_numbers = #tpu.dot_dimension_numbers<[1], [0], [0], [1], [0, 0, 1, 1], [], []>} : vector<8x128xf32>, vector<128x128xf32>, vector<8x128xf32> -> vector<8x128xf32>
    %14 = arith.addf %11, %13 : vector<8x128xf32>
    %c0_12 = arith.constant 0 : index
    %c0_13 = arith.constant 0 : index
    %15 = vector.load %arg8[%c0_12, %c0_13] : memref<8x128xf32, #tpu.memory_space<vmem>>, vector<8x128xf32>
    tpu.vector_store %arg8[%c0_12, %c0_13], %14 {strides = array<i32>} : memref<8x128xf32, #tpu.memory_space<vmem>>, vector<8x128xf32>,
    %c0_i32_14 = arith.constant 0 : i32
    %16 = arith.cmpi eq, %arg1, %c0_i32_14 : i32
    %17 = arith.extui %16 : i1 to i32
    %c0_i32_15 = arith.constant 0 : i32
    %18 = arith.cmpi ne, %17, %c0_i32_15 : i32
    scf.if %18 {
      %c0_16 = arith.constant 0 : index
      %c0_17 = arith.constant 0 : index
      %19 = vector.load %arg8[%c0_16, %c0_17] : memref<8x128xf32, #tpu.memory_space<vmem>>, vector<8x128xf32>
      %c0_18 = arith.constant 0 : index
      %c0_19 = arith.constant 0 : index
      %20 = vector.load %arg6[%c0_18, %c0_19] : memref<1x128xf32, #tpu.memory_space<vmem>>, vector<1x128xf32>
      %21 = vector.broadcast %20 : vector<1x128xf32> to vector<8x128xf32>
      %22 = arith.addf %19, %21 : vector<8x128xf32>
      %c0_20 = arith.constant 0 : index
      %c0_21 = arith.constant 0 : index
      %23 = vector.load %arg7[%c0_20, %c0_21] : memref<8x128xf32, #tpu.memory_space<vmem>>, vector<8x128xf32>
      tpu.vector_store %arg7[%c0_20, %c0_21], %22 {strides = array<i32>} : memref<8x128xf32, #tpu.memory_space<vmem>>, vector<8x128xf32>,
    } else {
    }
    return
  }
  func.func @transform_0(%arg0: i32, %arg1: i32) -> (i32, i32) {
    %c0_i32 = arith.constant 0 : i32
    %c0_i32_0 = arith.constant 0 : i32
    return %arg0, %c0_i32 : i32, i32
  }
  func.func @transform_1(%arg0: i32, %arg1: i32) -> (i32, i32) {
    %c0_i32 = arith.constant 0 : i32
    %c0_i32_0 = arith.constant 0 : i32
    return %c0_i32, %arg1 : i32, i32
  }
  func.func @transform_2(%arg0: i32, %arg1: i32) -> (i32, i32) {
    %c0_i32 = arith.constant 0 : i32
    %c0_i32_0 = arith.constant 0 : i32
    return %c0_i32, %arg1 : i32, i32
  }
  func.func @transform_3(%arg0: i32, %arg1: i32) -> (i32, i32) {
    %c0_i32 = arith.constant 0 : i32
    %c0_i32_0 = arith.constant 0 : i32
    return %arg1, %c0_i32 : i32, i32
  }
  func.func @transform_4(%arg0: i32, %arg1: i32) -> (i32, i32) {
    %c0_i32 = arith.constant 0 : i32
    %c0_i32_0 = arith.constant 0 : i32
    %c0_i32_1 = arith.constant 0 : i32
    return %c0_i32, %c0_i32_0 : i32, i32
  }
  func.func @transform_5(%arg0: i32, %arg1: i32) -> (i32, i32) {
    %c0_i32 = arith.constant 0 : i32
    %c0_i32_0 = arith.constant 0 : i32
    return %arg0, %c0_i32 : i32, i32
  }
}

</mosaic_0001>

<llo_original>
// kernel: _ffn_forward.1
$region0: #{_ffn_forward.1}
  #allocation0 [shape = 'u32[]', space=smem, size = 0x4, offset = 0x4, fixed_abs, tag = 'smem constant byte address 0x4 - core index']
  #allocation1 [shape = 'u32[144,128]{1,0:T(1,128)}', space=vmem, size = 0x12000, scoped, tag = 'internal scratch']
  #allocation2 [shape = 'f32[8,128]{1,0:T(8,128)}', space=vmem, size = 0x1000, scoped, tag = 'scratch operand']
  %s0 = inlined_call_operand.vmem [shape: f32[8,128], index: 0, kind: input, shape index: {}]
  %s1 = inlined_call_operand.hbm [shape: f32[128,128], index: 1, kind: input, shape index: {}]
  %s2 = inlined_call_operand.vmem [shape: f32[1,128], index: 2, kind: input, shape index: {}]
  %s3 = inlined_call_operand.hbm [shape: f32[128,128], index: 3, kind: input, shape index: {}]
  %s4 = inlined_call_operand.vmem [shape: f32[1,128], index: 4, kind: input, shape index: {}]
  %s5 = inlined_call_operand.vmem [shape: f32[8,128], index: 5, kind: output, shape index: {}]
  %s6 = sld [smem:[#allocation0]]
  $region46: #{_ffn_forward.1} parent=0
    _
  %s8 = ssub.s32 1, %s6
  %s9 = scalar_select 0, %s8, %s6
  $region1: #{_ffn_forward.1} parent=0
    #allocation3 [shape = 'u8[65536]{0}', space=vmem, size = 0x10000, scoped, tag = 'input window, operand 1, single buffered']
    #allocation4 [shape = 's32[1]{0}', space=sflag, size = 0x4, scoped, tag = 'scoped memory for _ffn_forward.1']
    #allocation5 [shape = 'u8[65536]{0}', space=vmem, size = 0x10000, scoped, tag = 'input window, operand 3, single buffered']
    #allocation6 [shape = 's32[1]{0}', space=sflag, size = 0x4, scoped, tag = 'scoped memory for _ffn_forward.1']
    %10 = vsyncpa [#allocation4], 0
    %11 = vsyncpa [#allocation6], 0
    // Predicated region
    $region2: #{_ffn_forward.1} parent=1 // pred_check
      _
    $region3: #{_ffn_forward.1} parent=1 // pred_check_branch
      %13 = sbr.rel (0) target = $region5
    $region4: #{_ffn_forward.1} parent=1 // pred_region
      _
    $region5: #{_ffn_forward.1} parent=1 // pred_fallthru
      _
    // Predicated region
    $region6: #{_ffn_forward.1} parent=1 // pred_check
      _
    $region7: #{_ffn_forward.1} parent=1 // pred_check_branch
      %15 = sbr.rel (0) target = $region9
    $region8: #{_ffn_forward.1} parent=1 // pred_region
      %s17 = ssub.s32 2048, 2048
      %18 = vsyncadd [#allocation4], %s17
      %s19 = sshll.u32 [#allocation3], 4
      %s20 = int_to_ptr.vmem [resolvable:$true] %s19
      %25 = dma.hbm_to_vmem [thread:$0]  %s1, 2048, %s20, [#allocation4], 128, 128, 8
    $region9: #{_ffn_forward.1} parent=1 // pred_fallthru
      _
    // Predicated region
    $region10: #{_ffn_forward.1} parent=1 // pred_check
      _
    $region11: #{_ffn_forward.1} parent=1 // pred_check_branch
      %27 = sbr.rel (0) target = $region13
    $region12: #{_ffn_forward.1} parent=1 // pred_region
      _
    $region13: #{_ffn_forward.1} parent=1 // pred_fallthru
      _
    // Predicated region
    $region14: #{_ffn_forward.1} parent=1 // pred_check
      _
    $region15: #{_ffn_forward.1} parent=1 // pred_check_branch
      %29 = sbr.rel (0) target = $region17
    $region16: #{_ffn_forward.1} parent=1 // pred_region
      %s31 = ssub.s32 2048, 2048
      %32 = vsyncadd [#allocation6], %s31
      %s33 = sshll.u32 [#allocation5], 4
      %s34 = int_to_ptr.vmem [resolvable:$true] %s33
      %39 = dma.hbm_to_vmem [thread:$0]  %s3, 2048, %s34, [#allocation6], 128, 128, 8
    $region17: #{_ffn_forward.1} parent=1 // pred_fallthru
      _
    // Predicated region
    $region18: #{_ffn_forward.1} parent=1 // pred_check
      _
    $region19: #{_ffn_forward.1} parent=1 // pred_check_branch
      %41 = sbr.rel (0) target = $region21
    $region20: #{_ffn_forward.1} parent=1 // pred_region
      _
    $region21: #{_ffn_forward.1} parent=1 // pred_fallthru
      _
    // Predicated region
    $region22: #{_ffn_forward.1} parent=1 // pred_check
      _
    $region23: #{_ffn_forward.1} parent=1 // pred_check_branch
      %43 = sbr.rel (0) target = $region25
    $region24: #{_ffn_forward.1} parent=1 // pred_region
      %44 = dma.done [#allocation4], 2048
    $region25: #{_ffn_forward.1} parent=1 // pred_fallthru
      _
    // Predicated region
    $region26: #{_ffn_forward.1} parent=1 // pred_check
      _
    $region27: #{_ffn_forward.1} parent=1 // pred_check_branch
      %46 = sbr.rel (0) target = $region29
    $region28: #{_ffn_forward.1} parent=1 // pred_region
      %47 = dma.done [#allocation6], 2048
    $region29: #{_ffn_forward.1} parent=1 // pred_fallthru
      _
    %p48 = scmp.eq.s32.totalorder 0, 0
    // Predicated region
    $region30: #{_ffn_forward.1} parent=1 // pred_check
      %p49 = pneg %p48
    $region31: #{_ffn_forward.1} parent=1 // pred_check_branch
      %51 = sbr.rel (%p49) target = $region33
    $region32: #{_ffn_forward.1} parent=1 // pred_region
      %52 = vst [vmem:[#allocation2] sm:$0xff] 0.0
    $region33: #{_ffn_forward.1} parent=1 // pred_fallthru
      _
    %v53 = vld [vmem:[%s0] sm:$0xff]
    %v54 = vld [vmem:[#allocation3] sm:$0xff]
    %v55 = vld [vmem:[#allocation3 + $0x8] sm:$0xff]
    %v56 = vld [vmem:[#allocation3 + $0x10] sm:$0xff]
    %v57 = vld [vmem:[#allocation3 + $0x18] sm:$0xff]
    %v58 = vld [vmem:[#allocation3 + $0x20] sm:$0xff]
    %v59 = vld [vmem:[#allocation3 + $0x28] sm:$0xff]
    %v60 = vld [vmem:[#allocation3 + $0x30] sm:$0xff]
    %v61 = vld [vmem:[#allocation3 + $0x38] sm:$0xff]
    %v62 = vld [vmem:[#allocation3 + $0x40] sm:$0xff]
    %v63 = vld [vmem:[#allocation3 + $0x48] sm:$0xff]
    %v64 = vld [vmem:[#allocation3 + $0x50] sm:$0xff]
    %v65 = vld [vmem:[#allocation3 + $0x58] sm:$0xff]
    %v66 = vld [vmem:[#allocation3 + $0x60] sm:$0xff]
    %v67 = vld [vmem:[#allocation3 + $0x68] sm:$0xff]
    %v68 = vld [vmem:[#allocation3 + $0x70] sm:$0xff]
    %v69 = vld [vmem:[#allocation3 + $0x78] sm:$0xff]
    %v70 = vld [vmem:[%s2] sm:$0x1]
    %v72 = vlaneseq
    %v73 = vshrl.u32 %v72, 7
    %v74 = vsub.s32 0, %v73
    %v75 = vrot.slane %v70, %v74
    %77 = vmatprep.subr.mxu0 0.0
    %78 = vmatpush1.msra.mxu0 %v54
    %79 = vmatprep.subr.mxu0 0.0
    %80 = vmatpush1.msra.mxu0 %v55
    %81 = vmatprep.subr.mxu0 0.0
    %82 = vmatpush1.msra.mxu0 %v56
    %83 = vmatprep.subr.mxu0 0.0
    %84 = vmatpush1.msra.mxu0 %v57
    %85 = vmatprep.subr.mxu0 0.0
    %86 = vmatpush1.msra.mxu0 %v58
    %87 = vmatprep.subr.mxu0 0.0
    %88 = vmatpush1.msra.mxu0 %v59
    %89 = vmatprep.subr.mxu0 0.0
    %90 = vmatpush1.msra.mxu0 %v60
    %91 = vmatprep.subr.mxu0 0.0
    %92 = vmatpush1.msra.mxu0 %v61
    %93 = vmatprep.subr.mxu0 0.0
    %94 = vmatpush1.msra.mxu0 %v62
    %95 = vmatprep.subr.mxu0 0.0
    %96 = vmatpush1.msra.mxu0 %v63
    %97 = vmatprep.subr.mxu0 0.0
    %98 = vmatpush1.msra.mxu0 %v64
    %99 = vmatprep.subr.mxu0 0.0
    %100 = vmatpush1.msra.mxu0 %v65
    %101 = vmatprep.subr.mxu0 0.0
    %102 = vmatpush1.msra.mxu0 %v66
    %103 = vmatprep.subr.mxu0 0.0
    %104 = vmatpush1.msra.mxu0 %v67
    %105 = vmatprep.subr.mxu0 0.0
    %106 = vmatpush1.msra.mxu0 %v68
    %107 = vmatprep.subr.mxu0 0.0
    %108 = vmatpush1.msra.mxu0 %v69
    %109 = vmatprep.subr.mxu0 0.0
    %110 = vmatpush1.msra.mxu0 0.0
    %111 = vmatprep.subr.mxu0 0.0
    %112 = vmatpush1.msra.mxu0 0.0
    %113 = vmatprep.subr.mxu0 0.0
    %114 = vmatpush1.msra.mxu0 0.0
    %115 = vmatprep.subr.mxu0 0.0
    %116 = vmatpush1.msra.mxu0 0.0
    %117 = vmatprep.subr.mxu0 0.0
    %118 = vmatpush1.msra.mxu0 0.0
    %119 = vmatprep.subr.mxu0 0.0
    %120 = vmatpush1.msra.mxu0 0.0
    %121 = vmatprep.subr.mxu0 0.0
    %122 = vmatpush1.msra.mxu0 0.0
    %123 = vmatprep.subr.mxu0 0.0
    %124 = vmatpush1.msra.mxu0 0.0
    %125 = vmatprep.subr.mxu0 0.0
    %126 = vmatpush1.msra.mxu0 0.0
    %127 = vmatprep.subr.mxu0 0.0
    %128 = vmatpush1.msra.mxu0 0.0
    %129 = vmatprep.subr.mxu0 0.0
    %130 = vmatpush1.msra.mxu0 0.0
    %131 = vmatprep.subr.mxu0 0.0
    %132 = vmatpush1.msra.mxu0 0.0
    %133 = vmatprep.subr.mxu0 0.0
    %134 = vmatpush1.msra.mxu0 0.0
    %135 = vmatprep.subr.mxu0 0.0
    %136 = vmatpush1.msra.mxu0 0.0
    %137 = vmatprep.subr.mxu0 0.0
    %138 = vmatpush1.msra.mxu0 0.0
    %139 = vmatprep.subr.mxu0 0.0
    %140 = vmatpush1.msra.mxu0 0.0
    %141 = vmatprep.mubr.f32.mxu0 0.0
    %142 = vmatmul.mubr.f32.gmra.mrb[0].mxu0 %v53
    %v143 = vpop.f32.mrb[0].mxu0
    %v144 = vadd.f32 %v75, %v143
    %v145 = vpop.f32.mrb[0].mxu0
    %146 = vdwg.mxu0
    %v147 = vmax.f32 %v144, 0.0
    %v148 = vld [vmem:[#allocation2] sm:$0xff]
    %v149 = vld [vmem:[#allocation5] sm:$0xff]
    %v150 = vld [vmem:[#allocation5 + $0x8] sm:$0xff]
    %v151 = vld [vmem:[#allocation5 + $0x10] sm:$0xff]
    %v152 = vld [vmem:[#allocation5 + $0x18] sm:$0xff]
    %v153 = vld [vmem:[#allocation5 + $0x20] sm:$0xff]
    %v154 = vld [vmem:[#allocation5 + $0x28] sm:$0xff]
    %v155 = vld [vmem:[#allocation5 + $0x30] sm:$0xff]
    %v156 = vld [vmem:[#allocation5 + $0x38] sm:$0xff]
    %v157 = vld [vmem:[#allocation5 + $0x40] sm:$0xff]
    %v158 = vld [vmem:[#allocation5 + $0x48] sm:$0xff]
    %v159 = vld [vmem:[#allocation5 + $0x50] sm:$0xff]
    %v160 = vld [vmem:[#allocation5 + $0x58] sm:$0xff]
    %v161 = vld [vmem:[#allocation5 + $0x60] sm:$0xff]
    %v162 = vld [vmem:[#allocation5 + $0x68] sm:$0xff]
    %v163 = vld [vmem:[#allocation5 + $0x70] sm:$0xff]
    %v164 = vld [vmem:[#allocation5 + $0x78] sm:$0xff]
    %165 = vmatprep.subr.mxu0 0.0
    %166 = vmatpush1.msra.mxu0 %v149
    %167 = vmatprep.subr.mxu0 0.0
    %168 = vmatpush1.msra.mxu0 %v150
    %169 = vmatprep.subr.mxu0 0.0
    %170 = vmatpush1.msra.mxu0 %v151
    %171 = vmatprep.subr.mxu0 0.0
    %172 = vmatpush1.msra.mxu0 %v152
    %173 = vmatprep.subr.mxu0 0.0
    %174 = vmatpush1.msra.mxu0 %v153
    %175 = vmatprep.subr.mxu0 0.0
    %176 = vmatpush1.msra.mxu0 %v154
    %177 = vmatprep.subr.mxu0 0.0
    %178 = vmatpush1.msra.mxu0 %v155
    %179 = vmatprep.subr.mxu0 0.0
    %180 = vmatpush1.msra.mxu0 %v156
    %181 = vmatprep.subr.mxu0 0.0
    %182 = vmatpush1.msra.mxu0 %v157
    %183 = vmatprep.subr.mxu0 0.0
    %184 = vmatpush1.msra.mxu0 %v158
    %185 = vmatprep.subr.mxu0 0.0
    %186 = vmatpush1.msra.mxu0 %v159
    %187 = vmatprep.subr.mxu0 0.0
    %188 = vmatpush1.msra.mxu0 %v160
    %189 = vmatprep.subr.mxu0 0.0
    %190 = vmatpush1.msra.mxu0 %v161
    %191 = vmatprep.subr.mxu0 0.0
    %192 = vmatpush1.msra.mxu0 %v162
    %193 = vmatprep.subr.mxu0 0.0
    %194 = vmatpush1.msra.mxu0 %v163
    %195 = vmatprep.subr.mxu0 0.0
    %196 = vmatpush1.msra.mxu0 %v164
    %197 = vmatprep.subr.mxu0 0.0
    %198 = vmatpush1.msra.mxu0 0.0
    %199 = vmatprep.subr.mxu0 0.0
    %200 = vmatpush1.msra.mxu0 0.0
    %201 = vmatprep.subr.mxu0 0.0
    %202 = vmatpush1.msra.mxu0 0.0
    %203 = vmatprep.subr.mxu0 0.0
    %204 = vmatpush1.msra.mxu0 0.0
    %205 = vmatprep.subr.mxu0 0.0
    %206 = vmatpush1.msra.mxu0 0.0
    %207 = vmatprep.subr.mxu0 0.0
    %208 = vmatpush1.msra.mxu0 0.0
    %209 = vmatprep.subr.mxu0 0.0
    %210 = vmatpush1.msra.mxu0 0.0
    %211 = vmatprep.subr.mxu0 0.0
    %212 = vmatpush1.msra.mxu0 0.0
    %213 = vmatprep.subr.mxu0 0.0
    %214 = vmatpush1.msra.mxu0 0.0
    %215 = vmatprep.subr.mxu0 0.0
    %216 = vmatpush1.msra.mxu0 0.0
    %217 = vmatprep.subr.mxu0 0.0
    %218 = vmatpush1.msra.mxu0 0.0
    %219 = vmatprep.subr.mxu0 0.0
    %220 = vmatpush1.msra.mxu0 0.0
    %221 = vmatprep.subr.mxu0 0.0
    %222 = vmatpush1.msra.mxu0 0.0
    %223 = vmatprep.subr.mxu0 0.0
    %224 = vmatpush1.msra.mxu0 0.0
    %225 = vmatprep.subr.mxu0 0.0
    %226 = vmatpush1.msra.mxu0 0.0
    %227 = vmatprep.subr.mxu0 0.0
    %228 = vmatpush1.msra.mxu0 0.0
    %229 = vmatprep.mubr.f32.mxu0 0.0
    %230 = vmatmul.mubr.f32.gmra.mrb[0].mxu0 %v147
    %v231 = vpop.f32.mrb[0].mxu0
    %v232 = vadd.f32 0.0, %v231
    %v233 = vpop.f32.mrb[0].mxu0
    %234 = vdwg.mxu0
    %v235 = vadd.f32 %v148, %v232
    %236 = vst [vmem:[#allocation2] sm:$0xff] %v235
    // Predicated region
    $region34: #{_ffn_forward.1} parent=1 // pred_check
      %p237 = pneg %p48
    $region35: #{_ffn_forward.1} parent=1 // pred_check_branch
      %239 = sbr.rel (%p237) target = $region37
    $region36: #{_ffn_forward.1} parent=1 // pred_region
      %v240 = vld [vmem:[#allocation2] sm:$0xff]
      %v241 = vld [vmem:[%s4] sm:$0x1]
      %v243 = vlaneseq
      %v244 = vshrl.u32 %v243, 7
      %v245 = vsub.s32 0, %v244
      %v246 = vrot.slane %v241, %v245
      %v248 = vadd.f32 %v240, %v246
      %249 = vst [vmem:[%s5] sm:$0xff] %v248
    $region37: #{_ffn_forward.1} parent=1 // pred_fallthru
      _
    // Predicated region
    $region38: #{_ffn_forward.1} parent=1 // pred_check
      _
    $region39: #{_ffn_forward.1} parent=1 // pred_check_branch
      %251 = sbr.rel (0) target = $region41
    $region40: #{_ffn_forward.1} parent=1 // pred_region
      _
    $region41: #{_ffn_forward.1} parent=1 // pred_fallthru
      _
    // Predicated region
    $region42: #{_ffn_forward.1} parent=1 // pred_check
      _
    $region43: #{_ffn_forward.1} parent=1 // pred_check_branch
      %253 = sbr.rel (0) target = $region45
    $region44: #{_ffn_forward.1} parent=1 // pred_region
      _
    $region45: #{_ffn_forward.1} parent=1 // pred_fallthru
      _
    %254 = vsyncpa [#allocation4], 1
    %255 = vsyncpa [#allocation6], 1

</llo_original>
